<compile_context>
chip_gen: v5e
topology: v5e:2x2
jax: 0.10.0
libtpu: 0.0.40
codegen_flags: <defaults>
</compile_context>

<pallas_src>
import math
import functools

import jax
import jax.numpy as jnp
import numpy as np
from jax import lax
from jax.experimental import pallas as pl
from jax.experimental.pallas import tpu as pltpu


def _round_up(x, m):
    return ((x + m - 1) // m) * m


def _vmem_capacity_bytes():
    """Per-core VMEM capacity; conservative fallback if the query fails."""
    try:
        cap = getattr(pltpu.get_tpu_info(), "vmem_capacity_bytes", None)
        if cap:
            return int(cap)
    except Exception:
        pass
    return 64 << 20  # v7x per-TC VMEM (most conservative generation)


# --------------------------------------------------------------------------- #
# Fast path: table resident in VMEM, gather = one-hot matmul on the MXU.
# --------------------------------------------------------------------------- #
def _onehot_embed_kernel(ids_ref, table_ref, out_ref, *, scale):
    """ids_ref: (tm,1) i32 VMEM; table_ref: (V,D) VMEM; out_ref: (tm,D)."""
    tm = out_ref.shape[0]
    V = table_ref.shape[0]
    ids = ids_ref[...]                                            # (tm, 1)
    onehot = (lax.broadcasted_iota(jnp.int32, (tm, V), 1) == ids)
    onehot = onehot.astype(table_ref.dtype)                       # (tm, V)
    emb = jnp.dot(onehot, table_ref[...],
                  preferred_element_type=jnp.float32)             # (tm, D) f32
    out_ref[...] = (emb * scale).astype(out_ref.dtype)


# --------------------------------------------------------------------------- #
# Large-vocab path: table stays in HBM, per-tile row gather DMA'd into out_ref.
# --------------------------------------------------------------------------- #
def _dma_gather_kernel(ids_ref, table_hbm, out_ref, copy_sem, *, scale,
                       token_tile):
    """ids_ref: (tm,) i32 SMEM; table_hbm: (V,D) HBM; out_ref: (tm,D) VMEM."""
    UNROLL = 8  # token_tile is always a multiple of 8

    def issue_chunk(c, carry):
        base = pl.multiple_of(c * UNROLL, UNROLL)
        for u in range(UNROLL):                 # static unroll: overlaps SMEM id
            r = base + u                        # loads with descriptor pushes
            tok = ids_ref[r]
            pltpu.make_async_copy(
                table_hbm.at[pl.ds(tok, 1), :],
                out_ref.at[pl.ds(r, 1), :],
                copy_sem,
            ).start()
        return carry

    lax.fori_loop(0, token_tile // UNROLL, issue_chunk, 0)

    # Single aggregate wait: DMA semaphores account by bytes, so one (tm, D)
    # descriptor exactly balances the tm single-row copies started above.
    pltpu.make_async_copy(
        table_hbm.at[pl.ds(0, token_tile), :],
        out_ref,
        copy_sem,
    ).wait()

    out_ref[...] = out_ref[...] * scale         # scale in place (no extra copy)


def input_embedding(ids, table, d_model, *, token_tile=512, out_dtype=None,
                    max_onehot_vocab=2048):
    """ids: (B, S) int; table: (vocab, d_model) -> (B, S, d_model)."""
    B, S = ids.shape
    V, D = table.shape
    assert D == d_model
    out_dtype = jnp.dtype(table.dtype if out_dtype is None else out_dtype)
    N = B * S

    table_bytes = V * D * jnp.dtype(table.dtype).itemsize
    vmem_cap = _vmem_capacity_bytes()
    # Fast path gate: whole table must fit with headroom for the double-buffered
    # output tiles (threshold halves automatically on v7x), and the vocab must be
    # small enough that the (tm, V) one-hot intermediate stays cheap.
    use_onehot = (table_bytes <= vmem_cap // 4) and (V <= max_onehot_vocab)

    # Token tile: big by default (amortize ~0.35us/step), multiple of 8, shrunk
    # for tiny problems so we don't pad excessively.
    tm = min(token_tile, _round_up(N, 8))
    if not use_onehot:
        # keep the aggregate-wait descriptor (tm rows of the table) in bounds
        tm = min(tm, max(8, (V // 8) * 8))
    tm = _round_up(tm, 8)
    n_pad = _round_up(N, tm)

    # Clamp out-of-range ids (nn.Embedding would raise; we keep DMAs in bounds).
    ids_flat = jnp.clip(ids.reshape(N).astype(jnp.int32), 0, V - 1)
    if n_pad != N:
        ids_flat = jnp.pad(ids_flat, (0, n_pad - N))   # pad tokens look up row 0

    scale = float(math.sqrt(d_model))
    grid = (n_pad // tm,)
    out_itemsize = jnp.dtype(out_dtype).itemsize

    if use_onehot:
        kernel = functools.partial(_onehot_embed_kernel, scale=scale)
        vmem_limit = int(min(vmem_cap, max(
            32 << 20,
            2 * table_bytes + 2 * tm * D * out_itemsize + tm * V * 4 + (4 << 20))))
        out_flat = pl.pallas_call(
            kernel,
            out_shape=jax.ShapeDtypeStruct((n_pad, D), out_dtype),
            grid=grid,
            in_specs=[
                pl.BlockSpec((tm, 1), lambda i: (i, 0)),   # per-tile ids (VMEM)
                pl.BlockSpec((V, D), lambda i: (0, 0)),    # whole table, VMEM-resident
            ],
            out_specs=pl.BlockSpec((tm, D), lambda i: (i, 0)),
            compiler_params=pltpu.CompilerParams(
                dimension_semantics=("parallel",),
                vmem_limit_bytes=vmem_limit),
        )(ids_flat.reshape(n_pad, 1), table)
    else:
        kernel = functools.partial(_dma_gather_kernel, scale=scale,
                                   token_tile=tm)
        tbl_itemsize = jnp.dtype(table.dtype).itemsize
        vmem_limit = int(min(vmem_cap, max(
            32 << 20, 2 * tm * D * tbl_itemsize + (4 << 20))))
        out_flat = pl.pallas_call(
            kernel,
            out_shape=jax.ShapeDtypeStruct((n_pad, D), table.dtype),
            grid=grid,
            in_specs=[
                pl.BlockSpec((tm,), lambda i: (i,),
                             memory_space=pltpu.MemorySpace.SMEM),  # per-tile ids
                pl.BlockSpec(memory_space=pl.ANY),                  # table in HBM
            ],
            out_specs=pl.BlockSpec((tm, D), lambda i: (i, 0)),
            scratch_shapes=[pltpu.SemaphoreType.DMA(())],
            compiler_params=pltpu.CompilerParams(
                dimension_semantics=("arbitrary",),
                vmem_limit_bytes=vmem_limit),
        )(ids_flat, table)
        if out_dtype != jnp.dtype(table.dtype):
            out_flat = out_flat.astype(out_dtype)

    # TODO(synk): cross-step double-buffering of the HBM row gather (manual P4)
    # and explicit core_parallel sharding for v7x are not implemented; they only
    # matter when the large-vocab path is hot.
    return out_flat[:N].reshape(B, S, D)


if __name__ == "__main__":
    # Module hyperparameters (small, consistent with the forward pass).
    d_model = 128
    vocab_size = 64
    B, S = 2, 8

    key = jax.random.PRNGKey(0)
    k_ids, k_w = jax.random.split(key)

    # nn.Embedding default init is N(0, 1).
    table = jax.random.normal(k_w, (vocab_size, d_model), dtype=jnp.float32)
    ids = jax.random.randint(k_ids, (B, S), 0, vocab_size, dtype=jnp.int32)

    out = input_embedding(ids, table, d_model)
    out = jax.block_until_ready(out)

    # Reference (pure JAX) forward semantics.
    ref = table[ids] * math.sqrt(d_model)
    np.testing.assert_allclose(np.asarray(out), np.asarray(ref),
                               rtol=1e-5, atol=1e-4)

    print("KERNEL_OK")
</pallas_src>

<mosaic_0001>
module attributes {stable_mosaic.version = 11 : i64} {
  func.func @_onehot_embed_kernel(%arg0: i32, %arg1: memref<16x1xi32, #tpu.memory_space<vmem>>, %arg2: memref<64x128xf32, #tpu.memory_space<vmem>>, %arg3: memref<16x128xf32, #tpu.memory_space<vmem>>) attributes {dimension_semantics = [#tpu.dimension_semantics<parallel>], iteration_bounds = array<i64: 1>, scalar_prefetch = 0 : i64, scratch_operands = 0 : i64, tpu.core_type = #tpu.core_type<tc>, window_params = [{transform_indices = @transform_0, window_bounds = array<i64: 16, 1>}, {pipeline_mode = #tpu.pipeline_mode<synchronous>, transform_indices = @transform_1, window_bounds = array<i64: 64, 128>}, {transform_indices = @transform_2, window_bounds = array<i64: 16, 128>}]} {
    %c0 = arith.constant 0 : index
    %c0_0 = arith.constant 0 : index
    %0 = vector.load %arg1[%c0, %c0_0] : memref<16x1xi32, #tpu.memory_space<vmem>>, vector<16x1xi32>
    %1 = tpu.iota {dimensions = array<i32: 1>} : vector<16x64xi32>
    %2 = vector.broadcast %0 : vector<16x1xi32> to vector<16x64xi32>
    %3 = arith.cmpi eq, %1, %2 : vector<16x64xi32>
    %4 = arith.extui %3 : vector<16x64xi1> to vector<16x64xi32>
    %5 = arith.sitofp %4 : vector<16x64xi32> to vector<16x64xf32>
    %c0_1 = arith.constant 0 : index
    %c0_2 = arith.constant 0 : index
    %6 = vector.load %arg2[%c0_1, %c0_2] : memref<64x128xf32, #tpu.memory_space<vmem>>, vector<64x128xf32>
    %cst = arith.constant dense<0.000000e+00> : vector<16x128xf32>
    %7 = tpu.matmul %5, %6, %cst {dimension_numbers = #tpu.dot_dimension_numbers<[1], [0], [0], [1], [0, 0, 1, 1], [], []>} : vector<16x64xf32>, vector<64x128xf32>, vector<16x128xf32> -> vector<16x128xf32>
    %cst_3 = arith.constant 11.3137083 : f32
    %8 = vector.broadcast %cst_3 : f32 to vector<16x128xf32>
    %9 = arith.mulf %7, %8 : vector<16x128xf32>
    %c0_4 = arith.constant 0 : index
    %c0_5 = arith.constant 0 : index
    %10 = vector.load %arg3[%c0_4, %c0_5] : memref<16x128xf32, #tpu.memory_space<vmem>>, vector<16x128xf32>
    tpu.vector_store %arg3[%c0_4, %c0_5], %9 {strides = array<i32>} : memref<16x128xf32, #tpu.memory_space<vmem>>, vector<16x128xf32>,
    return
  }
  func.func @transform_0(%arg0: i32) -> (i32, i32) {
    %c0_i32 = arith.constant 0 : i32
    %c0_i32_0 = arith.constant 0 : i32
    return %arg0, %c0_i32 : i32, i32
  }
  func.func @transform_1(%arg0: i32) -> (i32, i32) {
    %c0_i32 = arith.constant 0 : i32
    %c0_i32_0 = arith.constant 0 : i32
    %c0_i32_1 = arith.constant 0 : i32
    return %c0_i32, %c0_i32_0 : i32, i32
  }
  func.func @transform_2(%arg0: i32) -> (i32, i32) {
    %c0_i32 = arith.constant 0 : i32
    %c0_i32_0 = arith.constant 0 : i32
    return %arg0, %c0_i32 : i32, i32
  }
}

</mosaic_0001>

<llo_original>
// kernel: tpu_custom_call.1
$region0: #{tpu_custom_call.1}
  #allocation0 [shape = 'u32[]', space=smem, size = 0x4, offset = 0x4, fixed_abs, tag = 'smem constant byte address 0x4 - core index']
  #allocation1 [shape = 'u32[72,128]{1,0:T(1,128)}', space=vmem, size = 0x9000, scoped, tag = 'internal scratch']
  %s0 = inlined_call_operand.vmem [shape: s32[16,1], index: 0, kind: input, shape index: {}]
  %s1 = inlined_call_operand.hbm [shape: f32[64,128], index: 1, kind: input, shape index: {}]
  %s2 = inlined_call_operand.hbm [shape: f32[16,128], index: 2, kind: output, shape index: {}]
  %s3 = sld [smem:[#allocation0]]
  $region22: #{tpu_custom_call.1} parent=0
    _
  %s5 = ssub.s32 1, %s3
  %s6 = scalar_select 0, %s5, %s3
  $region1: #{tpu_custom_call.1} parent=0
    #allocation2 [shape = 'u8[32768]{0}', space=vmem, size = 0x8000, scoped, tag = 'input window, operand 1, single buffered']
    #allocation3 [shape = 's32[1]{0}', space=sflag, size = 0x4, scoped, tag = 'scoped memory for tpu_custom_call.1']
    #allocation4 [shape = 's32[1]{0}', space=sflag, size = 0x4, scoped, tag = 'scoped memory for tpu_custom_call.1']
    #allocation5 [shape = 'u8[8192]{0}', space=vmem, size = 0x2000, scoped, tag = 'output window, operand 0, single buffered']
    %7 = vsyncpa [#allocation3], 0
    %8 = vsyncpa [#allocation4], 0
    // Predicated region
    $region2: #{tpu_custom_call.1} parent=1 // pred_check
      _
    $region3: #{tpu_custom_call.1} parent=1 // pred_check_branch
      %10 = sbr.rel (0) target = $region5
    $region4: #{tpu_custom_call.1} parent=1 // pred_region
      _
    $region5: #{tpu_custom_call.1} parent=1 // pred_fallthru
      _
    // Predicated region
    $region6: #{tpu_custom_call.1} parent=1 // pred_check
      _
    $region7: #{tpu_custom_call.1} parent=1 // pred_check_branch
      %12 = sbr.rel (0) target = $region9
    $region8: #{tpu_custom_call.1} parent=1 // pred_region
      %14 = vsyncadd [#allocation3], 0
      %s15 = sshll.u32 %s1, 4
      %s16 = int_to_ptr.hbm [resolvable:$true] %s15
      %s17 = sshll.u32 [#allocation2], 4
      %s18 = int_to_ptr.vmem [resolvable:$true] %s17
      %23 = dma.hbm_to_vmem [thread:$0]  %s16, 1024, %s18, [#allocation3], 128, 128, 8
    $region9: #{tpu_custom_call.1} parent=1 // pred_fallthru
      _
    // Predicated region
    $region10: #{tpu_custom_call.1} parent=1 // pred_check
      _
    $region11: #{tpu_custom_call.1} parent=1 // pred_check_branch
      %25 = sbr.rel (0) target = $region13
    $region12: #{tpu_custom_call.1} parent=1 // pred_region
      %27 = dma.done [#allocation3], 1024
    $region13: #{tpu_custom_call.1} parent=1 // pred_fallthru
      _
    %v28 = vld [vmem:[%s0] sm:$0xff]
    %v29 = vld [vmem:[%s0 + $0x8] sm:$0xff]
    %v30 = vlaneseq
    %v31 = vand.u32 %v30, 127
    %32 = vset.pattern.permute.xlu0 0
    %33 = vperm.xlu0 %32, %v28
    %v34 = vpop.permute.xlu0 %33
    %35 = vset.pattern.permute.xlu0 0
    %36 = vperm.xlu0 %35, %v29
    %v37 = vpop.permute.xlu0 %36
    %vm38 = vcmp.eq.s32.totalorder %v31, %v34
    %vm39 = vcmp.eq.s32.totalorder %v31, %v37
    %v40 = vsel %vm38, 1, 0
    %v41 = vsel %vm39, 1, 0
    %v42 = vcvt.s32.f32 %v40
    %v43 = vcvt.s32.f32 %v41
    %v44 = vld [vmem:[#allocation2] sm:$0xff]
    %v45 = vld [vmem:[#allocation2 + $0x8] sm:$0xff]
    %v46 = vld [vmem:[#allocation2 + $0x10] sm:$0xff]
    %v47 = vld [vmem:[#allocation2 + $0x18] sm:$0xff]
    %v48 = vld [vmem:[#allocation2 + $0x20] sm:$0xff]
    %v49 = vld [vmem:[#allocation2 + $0x28] sm:$0xff]
    %v50 = vld [vmem:[#allocation2 + $0x30] sm:$0xff]
    %v51 = vld [vmem:[#allocation2 + $0x38] sm:$0xff]
    %vm52 = vcmask 523264
    %v54 = vsel %vm52, %v42, 0
    %v57 = vsel %vm52, %v43, 0
    %59 = vmatpush.msra.mxu0 0.0
    %60 = vmatpush.msra.mxu0 0.0
    %61 = vmatpush.msra.mxu0 0.0
    %62 = vmatpush.msra.mxu0 0.0
    %63 = vmatpush.msra.mxu0 0.0
    %64 = vmatpush.msra.mxu0 0.0
    %65 = vmatpush.msra.mxu0 0.0
    %66 = vmatpush.msra.mxu0 0.0
    %67 = vmatpush.msra.mxu0 %v51
    %68 = vmatpush.msra.mxu0 %v50
    %69 = vmatpush.msra.mxu0 %v49
    %70 = vmatpush.msra.mxu0 %v48
    %71 = vmatpush.msra.mxu0 %v47
    %72 = vmatpush.msra.mxu0 %v46
    %73 = vmatpush.msra.mxu0 %v45
    %74 = vmatpush.msra.mxu0 %v44
    %75 = vmatmul.f32.gmra.mxu0 %v54
    %v76 = vpop.f32.mrf.mxu0
    %v77 = vadd.f32 0.0, %v76
    %78 = vmatmul.f32.gmra.mxu0 %v57
    %v79 = vpop.f32.mrf.mxu0
    %v80 = vadd.f32 0.0, %v79
    %81 = vdwg.mxu0
    %v82 = vmul.f32 %v77, 11.313708
    %v83 = vmul.f32 %v80, 11.313708
    %84 = vst [vmem:[#allocation5] sm:$0xff] %v82
    %85 = vst [vmem:[#allocation5 + $0x8] sm:$0xff] %v83
    // Predicated region
    $region14: #{tpu_custom_call.1} parent=1 // pred_check
      _
    $region15: #{tpu_custom_call.1} parent=1 // pred_check_branch
      %87 = sbr.rel (0) target = $region17
    $region16: #{tpu_custom_call.1} parent=1 // pred_region
      %89 = vsyncadd [#allocation4], 0
      %s90 = sshll.u32 [#allocation5], 4
      %s91 = int_to_ptr.vmem [resolvable:$true] %s90
      %s92 = sshll.u32 %s2, 4
      %s93 = int_to_ptr.hbm [resolvable:$true] %s92
      %98 = dma.vmem_to_hbm [thread:$0]  %s91, 256, %s93, [#allocation4], 128, 128, 8
    $region17: #{tpu_custom_call.1} parent=1 // pred_fallthru
      _
    // Predicated region
    $region18: #{tpu_custom_call.1} parent=1 // pred_check
      _
    $region19: #{tpu_custom_call.1} parent=1 // pred_check_branch
      %100 = sbr.rel (0) target = $region21
    $region20: #{tpu_custom_call.1} parent=1 // pred_region
      %102 = dma.done [#allocation4], 256
    $region21: #{tpu_custom_call.1} parent=1 // pred_fallthru
      _
    %103 = vsyncpa [#allocation3], 1
    %104 = vsyncpa [#allocation4], 1

</llo_original>
